<compile_context>
chip_gen: v7x
topology: tpu7x:2x2x1
jax: 0.10.0
libtpu: 0.0.40
codegen_flags: <defaults>
</compile_context>

<pallas_src>
import jax
import jax.numpy as jnp
from jax.experimental import pallas as pl
from jax.experimental.pallas import tpu as pltpu

IN_FEATURES = 100
OUT_FEATURES = 100
N_PAD = 128            # lane-aligned output width of the resident weight tile
MAX_BATCH_TILE = 2048  # max rows per grid step for large batches


def simple_module_kernel(x_ref, w_ref, b_ref, o_ref):
    # x_ref: [tb, 100], w_ref: [100, 128], b_ref: [1, 128], o_ref: [tb, 100]
    # Params already carry the folded transform: W' = 2*W^T (zero-padded to
    # 128 output lanes), b' = 2*b + 1, so out = max(x @ W' + b', 1).
    y = jnp.dot(x_ref[...], w_ref[...], preferred_element_type=jnp.float32)
    y = jnp.maximum(y + b_ref[...], 1.0)
    o_ref[...] = y[:, :OUT_FEATURES].astype(o_ref.dtype)


def _cdiv(a, b):
    return -(-a // b)


def _round_up(n, m):
    return ((n + m - 1) // m) * m


def _choose_batch_tile(batch):
    """Rows per grid step: balanced tiles, >= 2 steps when possible (v7x dual-TC)."""
    if batch < 16:
        # Single block covering the whole (tiny) batch; block dim == full array
        # dim, so the sublane-divisibility rule does not apply.
        return batch
    steps = max(2, _cdiv(batch, MAX_BATCH_TILE))
    return _round_up(_cdiv(batch, steps), 8)


def simple_module_forward(x, w_torch_layout, bias):
    """x: [B, 100] f32; w_torch_layout: [100, 100] f32 (torch [out, in]); bias: [100] f32."""
    B = x.shape[0]

    # One-time parameter transform (tiny; stays resident in VMEM across steps):
    # transpose to [in, out], fold *2 into W, fold *2 and +1 into the bias,
    # lane-align the output dim to 128 (padded columns are dropped on store).
    w_p = jnp.zeros((IN_FEATURES, N_PAD), jnp.float32)
    w_p = w_p.at[:, :OUT_FEATURES].set(2.0 * w_torch_layout.T.astype(jnp.float32))
    b_p = jnp.zeros((1, N_PAD), jnp.float32)
    b_p = b_p.at[0, :OUT_FEATURES].set(2.0 * bias.astype(jnp.float32) + 1.0)

    tb = _choose_batch_tile(B)
    steps = _cdiv(B, tb)

    cost = pl.CostEstimate(
        flops=2 * steps * tb * IN_FEATURES * N_PAD,
        transcendentals=0,
        bytes_accessed=4 * (B * IN_FEATURES + IN_FEATURES * N_PAD + N_PAD
                            + B * OUT_FEATURES),
    )

    return pl.pallas_call(
        simple_module_kernel,
        out_shape=jax.ShapeDtypeStruct((B, OUT_FEATURES), x.dtype),
        grid_spec=pltpu.PrefetchScalarGridSpec(
            num_scalar_prefetch=0,
            grid=(steps,),
            in_specs=[
                pl.BlockSpec((tb, IN_FEATURES), lambda i: (i, 0)),      # x streams
                pl.BlockSpec((IN_FEATURES, N_PAD), lambda i: (0, 0)),   # W resident
                pl.BlockSpec((1, N_PAD), lambda i: (0, 0)),             # b resident
            ],
            out_specs=pl.BlockSpec((tb, OUT_FEATURES), lambda i: (i, 0)),
        ),
        compiler_params=pltpu.CompilerParams(
            # Batch steps are independent: lets v7x shard them over its 2 TCs;
            # neutral on v5e/v6e.
            dimension_semantics=("parallel",),
        ),
        cost_estimate=cost,
    )(x, w_p, b_p)


if __name__ == "__main__":
    key = jax.random.PRNGKey(0)
    k_x, k_w, k_b, k_x2 = jax.random.split(key, 4)

    # torch Linear weight layout is [out, in]; init roughly like torch's default.
    bound = 1.0 / float(IN_FEATURES) ** 0.5
    w_torch_layout = jax.random.uniform(
        k_w, (OUT_FEATURES, IN_FEATURES), minval=-bound, maxval=bound,
        dtype=jnp.float32)
    bias = jax.random.uniform(
        k_b, (OUT_FEATURES,), minval=-bound, maxval=bound, dtype=jnp.float32)

    def ref_fn(x):
        return jnp.maximum(x @ w_torch_layout.T + bias, 0.0) * 2.0 + 1.0

    # Small batch: single block (tb == B).
    x_small = jax.random.normal(k_x, (8, IN_FEATURES), dtype=jnp.float32)
    out_small = jax.block_until_ready(
        simple_module_forward(x_small, w_torch_layout, bias))
    assert out_small.shape == (8, OUT_FEATURES)
    assert jnp.allclose(out_small, ref_fn(x_small), atol=1e-5, rtol=1e-5), \
        "mismatch vs reference (small batch)"

    # Batch exercising the multi-step grid with a ragged last block (no padding).
    x_big = jax.random.normal(k_x2, (40, IN_FEATURES), dtype=jnp.float32)
    out_big = jax.block_until_ready(
        simple_module_forward(x_big, w_torch_layout, bias))
    assert out_big.shape == (40, OUT_FEATURES)
    assert jnp.allclose(out_big, ref_fn(x_big), atol=1e-5, rtol=1e-5), \
        "mismatch vs reference (ragged batch)"

    print("KERNEL_OK")
</pallas_src>

<mosaic_0001>
module attributes {stable_mosaic.version = 11 : i64} {
  func.func @simple_module_kernel(%arg0: i32, %arg1: memref<8x100xf32, #tpu.memory_space<vmem>>, %arg2: memref<100x128xf32, #tpu.memory_space<vmem>>, %arg3: memref<1x128xf32, #tpu.memory_space<vmem>>, %arg4: memref<8x100xf32, #tpu.memory_space<vmem>>) attributes {dimension_semantics = [#tpu.dimension_semantics<parallel>], iteration_bounds = array<i64: 1>, scalar_prefetch = 0 : i64, scratch_operands = 0 : i64, tpu.core_type = #tpu.core_type<tc>, window_params = [{transform_indices = @transform_0, window_bounds = array<i64: 8, 100>}, {pipeline_mode = #tpu.pipeline_mode<synchronous>, transform_indices = @transform_1, window_bounds = array<i64: 100, 128>}, {pipeline_mode = #tpu.pipeline_mode<synchronous>, transform_indices = @transform_2, window_bounds = array<i64: 1, 128>}, {transform_indices = @transform_3, window_bounds = array<i64: 8, 100>}]} {
    %c0 = arith.constant 0 : index
    %c0_0 = arith.constant 0 : index
    %0 = vector.load %arg1[%c0, %c0_0] : memref<8x100xf32, #tpu.memory_space<vmem>>, vector<8x100xf32>
    %c0_1 = arith.constant 0 : index
    %c0_2 = arith.constant 0 : index
    %1 = vector.load %arg2[%c0_1, %c0_2] : memref<100x128xf32, #tpu.memory_space<vmem>>, vector<100x128xf32>
    %cst = arith.constant dense<0.000000e+00> : vector<8x128xf32>
    %2 = tpu.matmul %0, %1, %cst {dimension_numbers = #tpu.dot_dimension_numbers<[1], [0], [0], [1], [0, 0, 1, 1], [], []>} : vector<8x100xf32>, vector<100x128xf32>, vector<8x128xf32> -> vector<8x128xf32>
    %c0_3 = arith.constant 0 : index
    %c0_4 = arith.constant 0 : index
    %3 = vector.load %arg3[%c0_3, %c0_4] : memref<1x128xf32, #tpu.memory_space<vmem>>, vector<1x128xf32>
    %4 = vector.broadcast %3 : vector<1x128xf32> to vector<8x128xf32>
    %5 = arith.addf %2, %4 : vector<8x128xf32>
    %cst_5 = arith.constant 1.000000e+00 : f32
    %6 = vector.broadcast %cst_5 : f32 to vector<8x128xf32>
    %7 = arith.maximumf %5, %6 : vector<8x128xf32>
    %8 = vector.extract_strided_slice %7 {offsets = [0, 0], sizes = [8, 100], strides = [1, 1]} : vector<8x128xf32> to vector<8x100xf32>
    %c0_6 = arith.constant 0 : index
    %c0_7 = arith.constant 0 : index
    %9 = vector.load %arg4[%c0_6, %c0_7] : memref<8x100xf32, #tpu.memory_space<vmem>>, vector<8x100xf32>
    tpu.vector_store %arg4[%c0_6, %c0_7], %8 {strides = array<i32>} : memref<8x100xf32, #tpu.memory_space<vmem>>, vector<8x100xf32>,
    return
  }
  func.func @transform_0(%arg0: i32) -> (i32, i32) {
    %c0_i32 = arith.constant 0 : i32
    %c0_i32_0 = arith.constant 0 : i32
    return %arg0, %c0_i32 : i32, i32
  }
  func.func @transform_1(%arg0: i32) -> (i32, i32) {
    %c0_i32 = arith.constant 0 : i32
    %c0_i32_0 = arith.constant 0 : i32
    %c0_i32_1 = arith.constant 0 : i32
    return %c0_i32, %c0_i32_0 : i32, i32
  }
  func.func @transform_2(%arg0: i32) -> (i32, i32) {
    %c0_i32 = arith.constant 0 : i32
    %c0_i32_0 = arith.constant 0 : i32
    %c0_i32_1 = arith.constant 0 : i32
    return %c0_i32, %c0_i32_0 : i32, i32
  }
  func.func @transform_3(%arg0: i32) -> (i32, i32) {
    %c0_i32 = arith.constant 0 : i32
    %c0_i32_0 = arith.constant 0 : i32
    return %arg0, %c0_i32 : i32, i32
  }
}

</mosaic_0001>

<llo_original>
// kernel: tpu_custom_call.1
$region0: #{tpu_custom_call.1}
  #allocation0 [shape = 'u32[]', space=smem, size = 0x4, offset = 0x4, fixed_abs, tag = 'smem constant byte address 0x4 - core index']
  #allocation1 [shape = 'u32[144,128]{1,0:T(1,128)}', space=vmem, size = 0x12000, scoped, tag = 'internal scratch']
  %s0 = inlined_call_operand.hbm [shape: f32[8,100], index: 0, kind: input, shape index: {}]
  %s1 = inlined_call_operand.hbm [shape: f32[100,128], index: 1, kind: input, shape index: {}]
  %s2 = inlined_call_operand.vmem [shape: f32[1,128], index: 2, kind: input, shape index: {}]
  %s3 = inlined_call_operand.hbm [shape: f32[8,100], index: 3, kind: output, shape index: {}]
  %s4 = sld [smem:[#allocation0]]
  $region30: #{tpu_custom_call.1} parent=0
    _
  %s6 = ssub.s32 1, %s4
  %s7 = scalar_select 0, %s6, %s4
  $region1: #{tpu_custom_call.1} parent=0
    #allocation2 [shape = 'u8[4096]{0}', space=vmem, size = 0x1000, scoped, tag = 'input window, operand 0, single buffered']
    #allocation3 [shape = 's32[1]{0}', space=sflag, size = 0x4, scoped, tag = 'scoped memory for tpu_custom_call.1']
    #allocation4 [shape = 's32[1]{0}', space=sflag, size = 0x4, scoped, tag = 'scoped memory for tpu_custom_call.1']
    #allocation5 [shape = 'u8[53248]{0}', space=vmem, size = 0xd000, scoped, tag = 'input window, operand 1, single buffered']
    #allocation6 [shape = 's32[1]{0}', space=sflag, size = 0x4, scoped, tag = 'scoped memory for tpu_custom_call.1']
    #allocation7 [shape = 'u8[4096]{0}', space=vmem, size = 0x1000, scoped, tag = 'output window, operand 0, single buffered']
    %8 = vsyncpa [#allocation3], 0
    %9 = vsyncpa [#allocation6], 0
    %10 = vsyncpa [#allocation4], 0
    // Predicated region
    $region2: #{tpu_custom_call.1} parent=1 // pred_check
      _
    $region3: #{tpu_custom_call.1} parent=1 // pred_check_branch
      %12 = sbr.rel (0) target = $region5
    $region4: #{tpu_custom_call.1} parent=1 // pred_region
      %s14 = ssub.s32 128, 128
      %15 = vsyncadd [#allocation3], %s14
      %s17 = sshll.u32 [#allocation2], 4
      %s18 = int_to_ptr.vmem [resolvable:$true] %s17
      %20 = dma.hbm_to_vmem [thread:$0]  %s0, 128, %s18, [#allocation3]
    $region5: #{tpu_custom_call.1} parent=1 // pred_fallthru
      _
    // Predicated region
    $region6: #{tpu_custom_call.1} parent=1 // pred_check
      _
    $region7: #{tpu_custom_call.1} parent=1 // pred_check_branch
      %22 = sbr.rel (0) target = $region9
    $region8: #{tpu_custom_call.1} parent=1 // pred_region
      %s24 = ssub.s32 1664, 1664
      %25 = vsyncadd [#allocation6], %s24
      %s26 = sshll.u32 [#allocation5], 4
      %s27 = int_to_ptr.vmem [resolvable:$true] %s26
      %32 = dma.hbm_to_vmem [thread:$0]  %s1, 1664, %s27, [#allocation6], 128, 128, 8
    $region9: #{tpu_custom_call.1} parent=1 // pred_fallthru
      _
    // Predicated region
    $region10: #{tpu_custom_call.1} parent=1 // pred_check
      _
    $region11: #{tpu_custom_call.1} parent=1 // pred_check_branch
      %34 = sbr.rel (0) target = $region13
    $region12: #{tpu_custom_call.1} parent=1 // pred_region
      _
    $region13: #{tpu_custom_call.1} parent=1 // pred_fallthru
      _
    // Predicated region
    $region14: #{tpu_custom_call.1} parent=1 // pred_check
      _
    $region15: #{tpu_custom_call.1} parent=1 // pred_check_branch
      %36 = sbr.rel (0) target = $region17
    $region16: #{tpu_custom_call.1} parent=1 // pred_region
      %37 = dma.done [#allocation3], 128
    $region17: #{tpu_custom_call.1} parent=1 // pred_fallthru
      _
    // Predicated region
    $region18: #{tpu_custom_call.1} parent=1 // pred_check
      _
    $region19: #{tpu_custom_call.1} parent=1 // pred_check_branch
      %39 = sbr.rel (0) target = $region21
    $region20: #{tpu_custom_call.1} parent=1 // pred_region
      %40 = dma.done [#allocation6], 1664
    $region21: #{tpu_custom_call.1} parent=1 // pred_fallthru
      _
    %v41 = vld [vmem:[#allocation2] sm:$0xff]
    %v42 = vld [vmem:[#allocation5] sm:$0xff]
    %v43 = vld [vmem:[#allocation5 + $0x8] sm:$0xff]
    %v44 = vld [vmem:[#allocation5 + $0x10] sm:$0xff]
    %v45 = vld [vmem:[#allocation5 + $0x18] sm:$0xff]
    %v46 = vld [vmem:[#allocation5 + $0x20] sm:$0xff]
    %v47 = vld [vmem:[#allocation5 + $0x28] sm:$0xff]
    %v48 = vld [vmem:[#allocation5 + $0x30] sm:$0xff]
    %v49 = vld [vmem:[#allocation5 + $0x38] sm:$0xff]
    %v50 = vld [vmem:[#allocation5 + $0x40] sm:$0xff]
    %v51 = vld [vmem:[#allocation5 + $0x48] sm:$0xff]
    %v52 = vld [vmem:[#allocation5 + $0x50] sm:$0xff]
    %v53 = vld [vmem:[#allocation5 + $0x58] sm:$0xff]
    %v54 = vld [vmem:[#allocation5 + $0x60] sm:$0xf]
    %v55 = vld [vmem:[%s2] sm:$0x1]
    %v57 = vlaneseq
    %v58 = vshrl.u32 %v57, 7
    %v59 = vsub.s32 0, %v58
    %v60 = vrot.slane %v55, %v59
    %vm62 = vcmask 818176
    %v64 = vsel %vm62, %v41, 0
    %vm66 = vcmask 1043456
    %v68 = vsel %vm66, %v54, 0
    %70 = vmatprep.subr.mxu0 0.0
    %71 = vmatpush1.msra.mxu0 %v42
    %72 = vmatprep.subr.mxu0 0.0
    %73 = vmatpush1.msra.mxu0 %v43
    %74 = vmatprep.subr.mxu0 0.0
    %75 = vmatpush1.msra.mxu0 %v44
    %76 = vmatprep.subr.mxu0 0.0
    %77 = vmatpush1.msra.mxu0 %v45
    %78 = vmatprep.subr.mxu0 0.0
    %79 = vmatpush1.msra.mxu0 %v46
    %80 = vmatprep.subr.mxu0 0.0
    %81 = vmatpush1.msra.mxu0 %v47
    %82 = vmatprep.subr.mxu0 0.0
    %83 = vmatpush1.msra.mxu0 %v48
    %84 = vmatprep.subr.mxu0 0.0
    %85 = vmatpush1.msra.mxu0 %v49
    %86 = vmatprep.subr.mxu0 0.0
    %87 = vmatpush1.msra.mxu0 %v50
    %88 = vmatprep.subr.mxu0 0.0
    %89 = vmatpush1.msra.mxu0 %v51
    %90 = vmatprep.subr.mxu0 0.0
    %91 = vmatpush1.msra.mxu0 %v52
    %92 = vmatprep.subr.mxu0 0.0
    %93 = vmatpush1.msra.mxu0 %v53
    %94 = vmatprep.subr.mxu0 0.0
    %95 = vmatpush1.msra.mxu0 %v68
    %96 = vmatprep.subr.mxu0 0.0
    %97 = vmatpush1.msra.mxu0 0.0
    %98 = vmatprep.subr.mxu0 0.0
    %99 = vmatpush1.msra.mxu0 0.0
    %100 = vmatprep.subr.mxu0 0.0
    %101 = vmatpush1.msra.mxu0 0.0
    %102 = vmatprep.subr.mxu0 0.0
    %103 = vmatpush1.msra.mxu0 0.0
    %104 = vmatprep.subr.mxu0 0.0
    %105 = vmatpush1.msra.mxu0 0.0
    %106 = vmatprep.subr.mxu0 0.0
    %107 = vmatpush1.msra.mxu0 0.0
    %108 = vmatprep.subr.mxu0 0.0
    %109 = vmatpush1.msra.mxu0 0.0
    %110 = vmatprep.subr.mxu0 0.0
    %111 = vmatpush1.msra.mxu0 0.0
    %112 = vmatprep.subr.mxu0 0.0
    %113 = vmatpush1.msra.mxu0 0.0
    %114 = vmatprep.subr.mxu0 0.0
    %115 = vmatpush1.msra.mxu0 0.0
    %116 = vmatprep.subr.mxu0 0.0
    %117 = vmatpush1.msra.mxu0 0.0
    %118 = vmatprep.subr.mxu0 0.0
    %119 = vmatpush1.msra.mxu0 0.0
    %120 = vmatprep.subr.mxu0 0.0
    %121 = vmatpush1.msra.mxu0 0.0
    %122 = vmatprep.subr.mxu0 0.0
    %123 = vmatpush1.msra.mxu0 0.0
    %124 = vmatprep.subr.mxu0 0.0
    %125 = vmatpush1.msra.mxu0 0.0
    %126 = vmatprep.subr.mxu0 0.0
    %127 = vmatpush1.msra.mxu0 0.0
    %128 = vmatprep.subr.mxu0 0.0
    %129 = vmatpush1.msra.mxu0 0.0
    %130 = vmatprep.subr.mxu0 0.0
    %131 = vmatpush1.msra.mxu0 0.0
    %132 = vmatprep.subr.mxu0 0.0
    %133 = vmatpush1.msra.mxu0 0.0
    %134 = vmatprep.mubr.f32.mxu0 0.0
    %135 = vmatmul.mubr.f32.gmra.mrb[0].mxu0 %v64
    %v136 = vpop.f32.mrb[0].mxu0
    %v137 = vadd.f32 %v60, %v136
    %v138 = vpop.f32.mrb[0].mxu0
    %139 = vdwg.mxu0
    %v140 = vmax.f32 %v137, 1.0
    %141 = vst.msk [vmem:[#allocation7] sm:$0xff] %vm62, %v140
    // Predicated region
    $region22: #{tpu_custom_call.1} parent=1 // pred_check
      _
    $region23: #{tpu_custom_call.1} parent=1 // pred_check_branch
      %143 = sbr.rel (0) target = $region25
    $region24: #{tpu_custom_call.1} parent=1 // pred_region
      %s145 = ssub.s32 128, 128
      %146 = vsyncadd [#allocation4], %s145
      %s148 = sshll.u32 [#allocation7], 4
      %s149 = int_to_ptr.vmem [resolvable:$true] %s148
      %151 = dma.vmem_to_hbm [thread:$0]  %s149, 128, %s3, [#allocation4]
    $region25: #{tpu_custom_call.1} parent=1 // pred_fallthru
      _
    // Predicated region
    $region26: #{tpu_custom_call.1} parent=1 // pred_check
      _
    $region27: #{tpu_custom_call.1} parent=1 // pred_check_branch
      %153 = sbr.rel (0) target = $region29
    $region28: #{tpu_custom_call.1} parent=1 // pred_region
      %154 = dma.done [#allocation4], 128
    $region29: #{tpu_custom_call.1} parent=1 // pred_fallthru
      _
    %155 = vsyncpa [#allocation3], 1
    %156 = vsyncpa [#allocation6], 1
    %157 = vsyncpa [#allocation4], 1

</llo_original>
